<compile_context>
chip_gen: v7x
topology: tpu7x:2x2x1
jax: 0.10.0
libtpu: 0.0.40
codegen_flags: <defaults>
</compile_context>

<pallas_src>
import functools

import jax
import jax.numpy as jnp
from jax.experimental import pallas as pl
from jax.experimental.pallas import tpu as pltpu

GAMMA = 2.0        # module default
_SUB, _LANE = 8, 128


def _cdiv(a, b):
    return -(-a // b)


def _device_params():
    """Returns (num_cores, double-buffered input VMEM budget, vmem_limit_bytes)."""
    kind = ""
    try:
        kind = jax.devices()[0].device_kind.lower()
    except Exception:
        pass
    if "v7" in kind:
        # 2 TensorCores/chip, ~3.2 TB/s HBM, but only 64 MiB VMEM per core:
        # large blocks, tight total cap.
        return 2, 28 * 1024 * 1024, 40 * 1024 * 1024
    if any(v in kind for v in ("v4", "v5", "v6")):
        # Single TensorCore, 128 MiB physical VMEM (v5e default scoped limit is
        # only 16 MiB, so the explicit vmem_limit_bytes is mandatory).
        return 1, 48 * 1024 * 1024, 96 * 1024 * 1024
    # Unknown / older hardware: stay near the default scoped limits.
    return 1, 12 * 1024 * 1024, 28 * 1024 * 1024


def _focal_ce_partial_kernel(logits_ref, target_ref, out_ref, *, block_n, n_valid,
                             steps_per_core):
    """Accumulate (per core) the sum of per-row cross-entropy over its tiles."""
    core = pl.program_id(0)          # "parallel" axis -> one TensorCore each on v7x
    step = pl.program_id(1)          # "arbitrary" axis -> serial tiles per core

    @pl.when(step == 0)
    def _():
        out_ref[...] = jnp.zeros_like(out_ref)

    # Stream native dtype from HBM; cast to f32 in VMEM (bandwidth-bound kernel).
    x = logits_ref[...].astype(jnp.float32)   # (block_n, C)
    t = target_ref[...]                        # (block_n, 1) int32

    # Numerically-stable log-sum-exp per row.
    m = jnp.max(x, axis=-1, keepdims=True)                               # (block_n, 1)
    lse = jnp.log(jnp.sum(jnp.exp(x - m), axis=-1, keepdims=True)) + m   # (block_n, 1)

    # Gather the target-class logit via one-hot select (VPU path, no MXU/gather).
    col = jax.lax.broadcasted_iota(jnp.int32, x.shape, 1)                # (block_n, C)
    tgt_logit = jnp.sum(jnp.where(col == t, x, 0.0), axis=-1, keepdims=True)

    ce = lse - tgt_logit             # -log p_target per row, (block_n, 1)

    # Mask rows beyond the true batch (partial last tile and clamped trailing
    # grid steps).  Must stay a select, not a multiply, so NaN/Inf garbage in
    # out-of-bounds rows cannot propagate.
    row0 = (core * steps_per_core + step) * block_n
    row = row0 + jax.lax.broadcasted_iota(jnp.int32, ce.shape, 0)
    ce = jnp.where(row < n_valid, ce, 0.0)

    # Accumulate this tile's CE sum into the core's resident output block
    # (broadcast across the (1, 8, 128) block; wrapper reads [core, 0, 0]).
    out_ref[...] = out_ref[...] + jnp.sum(ce)


def focal_loss(logits, target, gamma=GAMMA, *, block_rows=None):
    """logits: (N, C) float (any dtype); target: (N,) int.  Scalar float32 loss.

    Matches the PyTorch module's forward exactly.  `block_rows` (optional)
    caps the tile height — used only for testing the multi-tile path.
    """
    n, c = logits.shape
    target2d = target.astype(jnp.int32).reshape(n, 1)

    num_cores, budget, vmem_limit = _device_params()

    # Sublane packing: block_n must be a multiple of 8 (f32) / 16 (bf16) / 32 (i8).
    itemsize = jnp.dtype(logits.dtype).itemsize
    sub = max(_SUB, 32 // itemsize)

    # VMEM bytes per row, double-buffered: logits lane-pad C to 128 lanes; the
    # (block_n, 1) int32 target also lane-pads to 128 lanes (4*128 B/row).
    c_pad = _cdiv(c, _LANE) * _LANE
    per_row_bytes = 2 * (itemsize * c_pad + 4 * _LANE)
    cap = max(sub, (budget // per_row_bytes) // sub * sub)
    n_rounded = _cdiv(n, sub) * sub
    block_n = int(min(cap, n_rounded))
    if block_rows is not None:
        block_n = int(max(sub, min(block_n, _cdiv(block_rows, sub) * sub)))

    num_tiles = _cdiv(n, block_n)
    steps_per_core = _cdiv(num_tiles, num_cores)
    last_tile = num_tiles - 1

    def row_block_map(p, i):
        # Clamp so any trailing grid step past the real data just re-reads the
        # last tile; its rows are masked in-kernel.  No wrapper-side jnp.pad
        # (that would cost an extra full HBM read+write pass over (N, C)).
        return (jnp.minimum(p * steps_per_core + i, last_tile), 0)

    kernel = functools.partial(
        _focal_ce_partial_kernel,
        block_n=block_n, n_valid=n, steps_per_core=steps_per_core,
    )

    partials = pl.pallas_call(
        kernel,
        out_shape=jax.ShapeDtypeStruct((num_cores, _SUB, _LANE), jnp.float32),
        grid_spec=pltpu.PrefetchScalarGridSpec(
            num_scalar_prefetch=0,
            grid=(num_cores, steps_per_core),
            in_specs=[
                pl.BlockSpec((block_n, c), row_block_map),
                pl.BlockSpec((block_n, 1), row_block_map),
            ],
            out_specs=pl.BlockSpec((1, _SUB, _LANE), lambda p, i: (p, 0, 0)),
        ),
        compiler_params=pltpu.CompilerParams(
            dimension_semantics=("parallel", "arbitrary"),
            vmem_limit_bytes=vmem_limit,
        ),
    )(logits, target2d)

    # Tiny scalar epilogue on the per-core partial CE sums.
    ce_sum = jnp.sum(partials[:, 0, 0])
    logpt = ce_sum / jnp.float32(n)        # F.cross_entropy (mean NLL), >= 0
    pt = jnp.exp(logpt)
    return (1.0 - pt) ** gamma * logpt     # exact PyTorch-module semantics


def focal_loss_ref(logits, target, gamma=GAMMA):
    # Pure-JAX reference of the same PyTorch semantics.
    logp = jax.nn.log_softmax(logits.astype(jnp.float32), axis=-1)
    nll = -jnp.take_along_axis(logp, target[:, None].astype(jnp.int32), axis=-1)[:, 0]
    logpt = jnp.mean(nll)
    pt = jnp.exp(logpt)
    return (1.0 - pt) ** gamma * logpt


if __name__ == "__main__":
    key = jax.random.PRNGKey(0)
    k1, k2, k3, k4 = jax.random.split(key, 4)

    # Small shape consistent with the module's forward (N, C) + class targets.
    N, C = 8, 32
    logits = jax.random.normal(k1, (N, C), dtype=jnp.float32)
    target = jax.random.randint(k2, (N,), 0, C, dtype=jnp.int32)
    out = jax.block_until_ready(focal_loss(logits, target))
    ref = focal_loss_ref(logits, target)
    assert jnp.isfinite(out), "non-finite loss"
    assert jnp.allclose(out, ref, rtol=1e-5, atol=1e-5), (out, ref)

    # Multi-tile / partial-last-tile / clamped-trailing-block path (forced small blocks).
    N2, C2 = 600, 32
    logits2 = jax.random.normal(k3, (N2, C2), dtype=jnp.float32)
    target2 = jax.random.randint(k4, (N2,), 0, C2, dtype=jnp.int32)
    out2 = jax.block_until_ready(focal_loss(logits2, target2, block_rows=128))
    ref2 = focal_loss_ref(logits2, target2)
    assert jnp.isfinite(out2), "non-finite loss (tiled path)"
    assert jnp.allclose(out2, ref2, rtol=1e-5, atol=1e-5), (out2, ref2)

    # Native bf16 streaming path (cast happens inside the kernel; 16-row packing).
    logits3 = logits2.astype(jnp.bfloat16)
    out3 = jax.block_until_ready(focal_loss(logits3, target2, block_rows=160))
    ref3 = focal_loss_ref(logits3, target2)
    assert jnp.isfinite(out3), "non-finite loss (bf16 path)"
    assert jnp.allclose(out3, ref3, rtol=1e-4, atol=1e-4), (out3, ref3)

    print("KERNEL_OK")
</pallas_src>

<mosaic_0001>
module attributes {stable_mosaic.version = 11 : i64} {
  func.func @_focal_ce_partial_kernel(%arg0: i32, %arg1: i32, %arg2: memref<8x32xf32, #tpu.memory_space<vmem>>, %arg3: memref<8x1xi32, #tpu.memory_space<vmem>>, %arg4: memref<1x8x128xf32, #tpu.memory_space<vmem>>) attributes {dimension_semantics = [#tpu.dimension_semantics<parallel>, #tpu.dimension_semantics<arbitrary>], iteration_bounds = array<i64: 1, 1>, scalar_prefetch = 0 : i64, scratch_operands = 0 : i64, tpu.core_type = #tpu.core_type<tc>, window_params = [{transform_indices = @transform_0, window_bounds = array<i64: 8, 32>}, {transform_indices = @transform_1, window_bounds = array<i64: 8, 1>}, {transform_indices = @transform_2, window_bounds = array<i64: 1, 8, 128>}]} {
    %c0_i32 = arith.constant 0 : i32
    %0 = arith.cmpi eq, %arg1, %c0_i32 : i32
    %1 = arith.extui %0 : i1 to i32
    %c0_i32_0 = arith.constant 0 : i32
    %2 = arith.cmpi ne, %1, %c0_i32_0 : i32
    scf.if %2 {
      %cst_16 = arith.constant 0.000000e+00 : f32
      %40 = vector.broadcast %cst_16 : f32 to vector<1x8x128xf32>
      %c0_17 = arith.constant 0 : index
      %c0_18 = arith.constant 0 : index
      %c0_19 = arith.constant 0 : index
      %41 = vector.load %arg4[%c0_17, %c0_18, %c0_19] : memref<1x8x128xf32, #tpu.memory_space<vmem>>, vector<1x8x128xf32>
      tpu.vector_store %arg4[%c0_17, %c0_18, %c0_19], %40 {strides = array<i32>} : memref<1x8x128xf32, #tpu.memory_space<vmem>>, vector<1x8x128xf32>,
    } else {
    }
    %c0 = arith.constant 0 : index
    %c0_1 = arith.constant 0 : index
    %3 = vector.load %arg2[%c0, %c0_1] : memref<8x32xf32, #tpu.memory_space<vmem>>, vector<8x32xf32>
    %c0_2 = arith.constant 0 : index
    %c0_3 = arith.constant 0 : index
    %4 = vector.load %arg3[%c0_2, %c0_3] : memref<8x1xi32, #tpu.memory_space<vmem>>, vector<8x1xi32>
    %cst = arith.constant dense<0xFF800000> : vector<8xf32>
    %5 = vector.multi_reduction <maximumf>, %3, %cst [1] : vector<8x32xf32> to vector<8xf32>
    %6 = vector.shape_cast %5 : vector<8xf32> to vector<8x1xf32>
    %7 = vector.broadcast %6 : vector<8x1xf32> to vector<8x32xf32>
    %8 = arith.subf %3, %7 : vector<8x32xf32>
    %9 = math.exp %8 : vector<8x32xf32>
    %cst_4 = arith.constant dense<0.000000e+00> : vector<8xf32>
    %10 = vector.multi_reduction <add>, %9, %cst_4 [1] : vector<8x32xf32> to vector<8xf32>
    %11 = vector.shape_cast %10 : vector<8xf32> to vector<8x1xf32>
    %12 = math.log %11 : vector<8x1xf32>
    %13 = arith.addf %12, %6 : vector<8x1xf32>
    %14 = tpu.iota {dimensions = array<i32: 1>} : vector<8x32xi32>
    %15 = vector.broadcast %4 : vector<8x1xi32> to vector<8x32xi32>
    %16 = arith.cmpi eq, %14, %15 : vector<8x32xi32>
    %cst_5 = arith.constant 0.000000e+00 : f32
    %17 = vector.broadcast %cst_5 : f32 to vector<8x32xf32>
    %18 = arith.select %16, %3, %17 : vector<8x32xi1>, vector<8x32xf32>
    %cst_6 = arith.constant dense<0.000000e+00> : vector<8xf32>
    %19 = vector.multi_reduction <add>, %18, %cst_6 [1] : vector<8x32xf32> to vector<8xf32>
    %20 = vector.shape_cast %19 : vector<8xf32> to vector<8x1xf32>
    %21 = arith.subf %13, %20 : vector<8x1xf32>
    %c1_i32 = arith.constant 1 : i32
    %22 = arith.muli %arg0, %c1_i32 : i32
    %23 = arith.addi %22, %arg1 : i32
    %c8_i32 = arith.constant 8 : i32
    %24 = arith.muli %23, %c8_i32 : i32
    %25 = tpu.iota {dimensions = array<i32: 0>} : vector<8x1xi32>
    %26 = vector.broadcast %24 : i32 to vector<8x1xi32>
    %27 = arith.addi %26, %25 : vector<8x1xi32>
    %c8_i32_7 = arith.constant 8 : i32
    %28 = vector.broadcast %c8_i32_7 : i32 to vector<8x1xi32>
    %29 = arith.cmpi slt, %27, %28 : vector<8x1xi32>
    %cst_8 = arith.constant 0.000000e+00 : f32
    %30 = vector.broadcast %cst_8 : f32 to vector<8x1xf32>
    %31 = arith.select %29, %21, %30 : vector<8x1xi1>, vector<8x1xf32>
    %c0_9 = arith.constant 0 : index
    %c0_10 = arith.constant 0 : index
    %c0_11 = arith.constant 0 : index
    %32 = vector.load %arg4[%c0_9, %c0_10, %c0_11] : memref<1x8x128xf32, #tpu.memory_space<vmem>>, vector<1x8x128xf32>
    %33 = vector.shape_cast %31 : vector<8x1xf32> to vector<1x8x1xf32>
    %cst_12 = arith.constant dense<0.000000e+00> : vector<1xf32>
    %34 = vector.multi_reduction <add>, %33, %cst_12 [1, 2] : vector<1x8x1xf32> to vector<1xf32>
    %35 = vector.shape_cast %34 : vector<1xf32> to vector<1x1x1xf32>
    %36 = vector.extract %35[0, 0, 0] : f32 from vector<1x1x1xf32>
    %37 = vector.broadcast %36 : f32 to vector<1x8x128xf32>
    %38 = arith.addf %32, %37 : vector<1x8x128xf32>
    %c0_13 = arith.constant 0 : index
    %c0_14 = arith.constant 0 : index
    %c0_15 = arith.constant 0 : index
    %39 = vector.load %arg4[%c0_13, %c0_14, %c0_15] : memref<1x8x128xf32, #tpu.memory_space<vmem>>, vector<1x8x128xf32>
    tpu.vector_store %arg4[%c0_13, %c0_14, %c0_15], %38 {strides = array<i32>} : memref<1x8x128xf32, #tpu.memory_space<vmem>>, vector<1x8x128xf32>,
    return
  }
  func.func @transform_0(%arg0: i32, %arg1: i32) -> (i32, i32) {
    %c1_i32 = arith.constant 1 : i32
    %0 = arith.muli %arg0, %c1_i32 : i32
    %1 = arith.addi %0, %arg1 : i32
    %c0_i32 = arith.constant 0 : i32
    %2 = arith.minsi %1, %c0_i32 : i32
    %c0_i32_0 = arith.constant 0 : i32
    %c0_i32_1 = arith.constant 0 : i32
    return %2, %c0_i32_0 : i32, i32
  }
  func.func @transform_1(%arg0: i32, %arg1: i32) -> (i32, i32) {
    %c1_i32 = arith.constant 1 : i32
    %0 = arith.muli %arg0, %c1_i32 : i32
    %1 = arith.addi %0, %arg1 : i32
    %c0_i32 = arith.constant 0 : i32
    %2 = arith.minsi %1, %c0_i32 : i32
    %c0_i32_0 = arith.constant 0 : i32
    %c0_i32_1 = arith.constant 0 : i32
    return %2, %c0_i32_0 : i32, i32
  }
  func.func @transform_2(%arg0: i32, %arg1: i32) -> (i32, i32, i32) {
    %c0_i32 = arith.constant 0 : i32
    %c0_i32_0 = arith.constant 0 : i32
    %c0_i32_1 = arith.constant 0 : i32
    return %arg0, %c0_i32, %c0_i32_0 : i32, i32, i32
  }
}

</mosaic_0001>

<llo_original>
// kernel: tpu_custom_call.1
$region0: #{tpu_custom_call.1}
  #allocation0 [shape = 'u32[]', space=smem, size = 0x4, offset = 0x4, fixed_abs, tag = 'smem constant byte address 0x4 - core index']
  #allocation1 [shape = 'u32[144,128]{1,0:T(1,128)}', space=vmem, size = 0x12000, scoped, tag = 'internal scratch']
  %s0 = inlined_call_operand.vmem [shape: f32[8,32], index: 0, kind: input, shape index: {}]
  %s1 = inlined_call_operand.vmem [shape: s32[8,1], index: 1, kind: input, shape index: {}]
  %s2 = inlined_call_operand.hbm [shape: f32[1,8,128], index: 2, kind: output, shape index: {}]
  %s3 = sld [smem:[#allocation0]]
  $region22: #{tpu_custom_call.1} parent=0
    _
  %s5 = ssub.s32 1, %s3
  %s6 = scalar_select 0, %s5, %s3
  $region1: #{tpu_custom_call.1} parent=0
    #allocation2 [shape = 'u8[4096]{0}', space=vmem, size = 0x1000, scoped, tag = 'output window, operand 0, single buffered']
    #allocation3 [shape = 's32[1]{0}', space=sflag, size = 0x4, scoped, tag = 'scoped memory for tpu_custom_call.1']
    %7 = vsyncpa [#allocation3], 0
    // Predicated region
    $region2: #{tpu_custom_call.1} parent=1 // pred_check
      _
    $region3: #{tpu_custom_call.1} parent=1 // pred_check_branch
      %9 = sbr.rel (0) target = $region5
    $region4: #{tpu_custom_call.1} parent=1 // pred_region
      %s10 = sadd.s32 0, 0
      %p11 = scmp.lt.s32.totalorder %s10, 0
      %s12 = scalar_select %p11, %s10, 0
      %p13 = scmp.lt.s32.totalorder %s12, 0
      %s14 = scalar_select %p13, %s12, 0
      %s15 = smul.addr %s14, 8
      %s16 = scalar_lea.vmem %s0, %s15
      %s17 = sadd.s32 0, 0
      %p18 = scmp.lt.s32.totalorder %s17, 0
      %s19 = scalar_select %p18, %s17, 0
    $region5: #{tpu_custom_call.1} parent=1 // pred_fallthru
      _
    // Predicated region
    $region6: #{tpu_custom_call.1} parent=1 // pred_check
      _
    $region7: #{tpu_custom_call.1} parent=1 // pred_check_branch
      %21 = sbr.rel (0) target = $region9
    $region8: #{tpu_custom_call.1} parent=1 // pred_region
      %s22 = sadd.s32 0, 0
      %p23 = scmp.lt.s32.totalorder %s22, 0
      %s24 = scalar_select %p23, %s22, 0
      %p25 = scmp.lt.s32.totalorder %s24, 0
      %s26 = scalar_select %p25, %s24, 0
      %s27 = smul.addr %s26, 8
      %s28 = scalar_lea.vmem %s1, %s27
      %s29 = sadd.s32 0, 0
      %p30 = scmp.lt.s32.totalorder %s29, 0
      %s31 = scalar_select %p30, %s29, 0
    $region9: #{tpu_custom_call.1} parent=1 // pred_fallthru
      _
    %s32 = sadd.s32 0, 0
    %p33 = scmp.lt.s32.totalorder %s32, 0
    %s34 = scalar_select %p33, %s32, 0
    %p35 = scmp.lt.s32.totalorder %s34, 0
    %s36 = scalar_select %p35, %s34, 0
    %s37 = smul.addr %s36, 8
    %s38 = scalar_lea.vmem %s0, %s37
    %s39 = sadd.s32 0, 0
    %p40 = scmp.lt.s32.totalorder %s39, 0
    %s41 = scalar_select %p40, %s39, 0
    %p42 = scmp.lt.s32.totalorder %s41, 0
    %s43 = scalar_select %p42, %s41, 0
    %s44 = smul.addr %s43, 8
    %s45 = scalar_lea.vmem %s1, %s44
    %s46 = sadd.s32 0, 0
    %p47 = scmp.lt.s32.totalorder %s46, 0
    %s48 = scalar_select %p47, %s46, 0
    %p49 = scmp.lt.s32.totalorder %s48, 0
    %s50 = scalar_select %p49, %s48, 0
    %s51 = smul.addr %s50, 8
    %s52 = scalar_lea.vmem %s0, %s51
    %s53 = sadd.s32 0, 0
    %p54 = scmp.lt.s32.totalorder %s53, 0
    %s55 = scalar_select %p54, %s53, 0
    %s56 = sadd.s32 0, 0
    %p57 = scmp.lt.s32.totalorder %s56, 0
    %s58 = scalar_select %p57, %s56, 0
    %p59 = scmp.lt.s32.totalorder %s58, 0
    %s60 = scalar_select %p59, %s58, 0
    %s61 = smul.addr %s60, 8
    %s62 = scalar_lea.vmem %s1, %s61
    %s63 = sadd.s32 0, 0
    %p64 = scmp.lt.s32.totalorder %s63, 0
    %s65 = scalar_select %p64, %s63, 0
    %p66 = scmp.eq.s32.totalorder 0, 0
    // Predicated region
    $region10: #{tpu_custom_call.1} parent=1 // pred_check
      %p67 = pneg %p66
    $region11: #{tpu_custom_call.1} parent=1 // pred_check_branch
      %69 = sbr.rel (%p67) target = $region13
    $region12: #{tpu_custom_call.1} parent=1 // pred_region
      %70 = vst [vmem:[#allocation2] sm:$0xff] 0.0
    $region13: #{tpu_custom_call.1} parent=1 // pred_fallthru
      _
    %v71 = vld [vmem:[%s52] sm:$0xff]
    %v72 = vld [vmem:[%s62] sm:$0xff]
    %vm73 = vcmask 261120
    %v74 = vsel %vm73, %v71, -inf
    %75 = vmax.xlane.f32.xlu0 %v74
    %v76 = vpop.xlane.xlu0 %75
    %v77 = vsub.f32 %v71, %v76
    %v78 = vmul.f32 %v77, 1.442695
    %v79 = vpow.pop %v78
    %v80 = vsel %vm73, %v79, 0.0
    %81 = vadd.xlane.f32.xlu0 %v80
    %v82 = vpop.xlane.xlu0 %81
    %v83 = vlog2.pop %v82
    %v84 = vmul.f32 %v83, 0.6931472
    %v85 = vadd.f32 %v84, %v76
    %v86 = vlaneseq
    %v87 = vand.u32 %v86, 127
    %88 = vset.pattern.permute.xlu0 0
    %89 = vperm.xlu0 %88, %v72
    %v90 = vpop.permute.xlu0 %89
    %vm91 = vcmp.eq.s32.totalorder %v87, %v90
    %v92 = vsel %vm91, %v71, 0.0
    %v93 = vsel %vm73, %v92, 0.0
    %94 = vadd.xlane.f32.xlu0 %v93
    %v95 = vpop.xlane.xlu0 %94
    %v96 = vsub.f32 %v85, %v95
    %s97 = sadd.s32 0, 0
    %s98 = smul.u32 %s97, 8
    %v99 = vlaneseq
    %v100 = vshrl.u32 %v99, 7
    %v101 = vstv %s98
    %v102 = vadd.s32 %v101, %v100
    %vm103 = vcmp.lt.s32.totalorder %v102, 8
    %v104 = vsel %vm103, %v96, 0.0
    %v105 = vld [vmem:[#allocation2] sm:$0xff]
    %vm106 = vcmask 7168
    %v107 = vsel %vm106, %v104, 0.0
    %108 = vadd.xlane.f32.xlu0 %v107
    %v109 = vpop.xlane.xlu0 %108
    %v110 = vrot.slane %v109, 4
    %v111 = vadd.f32 %v109, %v110
    %v112 = vrot.slane %v111, 2
    %v113 = vadd.f32 %v111, %v112
    %v114 = vrot.slane %v113, 1
    %v115 = vadd.f32 %v113, %v114
    %s116 = vtos %v115
    %v117 = vstv %s116
    %v118 = vadd.f32 %v105, %v117
    %119 = vst [vmem:[#allocation2] sm:$0xff] %v118
    // Predicated region
    $region14: #{tpu_custom_call.1} parent=1 // pred_check
      _
    $region15: #{tpu_custom_call.1} parent=1 // pred_check_branch
      %121 = sbr.rel (0) target = $region17
    $region16: #{tpu_custom_call.1} parent=1 // pred_region
      %s123 = ssub.s32 128, 128
      %124 = vsyncadd [#allocation3], %s123
      %s126 = sshll.u32 [#allocation2], 4
      %s127 = int_to_ptr.vmem [resolvable:$true] %s126
      %129 = dma.vmem_to_hbm [thread:$0]  %s127, 128, %s2, [#allocation3]
    $region17: #{tpu_custom_call.1} parent=1 // pred_fallthru
      _
    // Predicated region
    $region18: #{tpu_custom_call.1} parent=1 // pred_check
      _
    $region19: #{tpu_custom_call.1} parent=1 // pred_check_branch
      %131 = sbr.rel (0) target = $region21
    $region20: #{tpu_custom_call.1} parent=1 // pred_region
      %132 = dma.done [#allocation3], 128
    $region21: #{tpu_custom_call.1} parent=1 // pred_fallthru
      _
    %133 = vsyncpa [#allocation3], 1

</llo_original>
